<compile_context>
chip_gen: v7x
topology: tpu7x:2x2x1
jax: 0.10.0
libtpu: 0.0.40
codegen_flags: <defaults>
</compile_context>

<pallas_src>
import functools

import jax
import jax.numpy as jnp
from jax.experimental import pallas as pl
from jax.experimental.pallas import tpu as pltpu


def _round_up(x: int, m: int) -> int:
    return ((x + m - 1) // m) * m


def mlp_kernel(x_ref, w1_ref, b1_ref, w2_ref, b2_ref, o_ref):
    # Layer 1: Linear(20 -> 128 padded) + ReLU, f32 operands, f32 accumulation on the MXU.
    h = jnp.dot(x_ref[...], w1_ref[...], preferred_element_type=jnp.float32)
    h = jnp.maximum(h + b1_ref[...], 0.0)            # b1 is (1, HPAD), broadcast across rows
    # Layer 2: Linear(128 padded -> 10) + ReLU.  Padded hidden rows of w2 are zero and the
    # padded hidden columns of h are exactly 0 after ReLU, so the math is exact.
    y = jnp.dot(h, w2_ref[...], preferred_element_type=jnp.float32)
    y = jnp.maximum(y + b2_ref[...], 0.0)            # b2 is (1, out_dim)
    o_ref[...] = y.astype(o_ref.dtype)               # narrow (tb, 10) store — minimal HBM write


@functools.partial(jax.jit, static_argnames=("block_batch",))
def net_forward(x, w1, b1, w2, b2, *, block_batch: int = 1024):
    """y = relu(relu(x @ w1 + b1) @ w2 + b2).

    x:  [batch, in_dim] f32
    w1: [in_dim, hidden], b1: [1, hidden]
    w2: [hidden, out_dim], b2: [1, out_dim]
    """
    batch, in_dim = x.shape
    hidden = w1.shape[1]
    out_dim = w2.shape[1]

    # Pad only the hidden feature dim (100 -> 128) so the intermediate is lane-dense.
    hpad = _round_up(hidden, 128)
    w1p = jnp.zeros((in_dim, hpad), jnp.float32).at[:, :hidden].set(w1.astype(jnp.float32))
    b1p = jnp.zeros((1, hpad), jnp.float32).at[:, :hidden].set(b1.astype(jnp.float32))
    w2p = jnp.zeros((hpad, out_dim), jnp.float32).at[:hidden, :].set(w2.astype(jnp.float32))
    b2p = b2.astype(jnp.float32).reshape(1, out_dim)

    # Batch tile: big (amortize ~0.35us/step overhead), sublane-aligned, and chosen so the grid
    # has >= 2 tiles whenever batch allows it (keeps both v7x TensorCores fed).
    tb = min(block_batch, max(8, _round_up(pl.cdiv(batch, 2), 8)))
    grid = (pl.cdiv(batch, tb),)   # last block may be partial; Pallas masks it.

    out = pl.pallas_call(
        mlp_kernel,
        out_shape=jax.ShapeDtypeStruct((batch, out_dim), jnp.float32),
        grid=grid,
        in_specs=[
            pl.BlockSpec((tb, in_dim), lambda i: (i, 0)),       # x: streamed per batch tile
            pl.BlockSpec((in_dim, hpad), lambda i: (0, 0)),     # w1: VMEM-resident
            pl.BlockSpec((1, hpad), lambda i: (0, 0)),          # b1: VMEM-resident
            pl.BlockSpec((hpad, out_dim), lambda i: (0, 0)),    # w2: VMEM-resident
            pl.BlockSpec((1, out_dim), lambda i: (0, 0)),       # b2: VMEM-resident
        ],
        out_specs=pl.BlockSpec((tb, out_dim), lambda i: (i, 0)),
        compiler_params=pltpu.CompilerParams(
            dimension_semantics=("parallel",),                  # batch tiles shard across TCs
        ),
        cost_estimate=pl.CostEstimate(
            flops=2 * batch * (in_dim * hpad + hpad * out_dim),
            bytes_accessed=(x.size * 4
                            + (in_dim * hpad + hpad * out_dim + hpad + out_dim) * 4
                            + batch * out_dim * 4),
            transcendentals=0,
        ),
    )(x.astype(jnp.float32), w1p, b1p, w2p, b2p)

    return out


def init_linear(key, in_size, out_size, dtype=jnp.float32):
    # Deterministic init mimicking PyTorch nn.Linear default:
    # U(-1/sqrt(in_size), 1/sqrt(in_size)) for both weight and bias.
    kw, kb = jax.random.split(key)
    bound = 1.0 / jnp.sqrt(jnp.float32(in_size))
    w = jax.random.uniform(kw, (in_size, out_size), dtype, -bound, bound)
    b = jax.random.uniform(kb, (1, out_size), dtype, -bound, bound)
    return w, b


def _reference_f32(x, w1, b1, w2, b2):
    return jnp.maximum(jnp.maximum(x @ w1 + b1, 0.0) @ w2 + b2, 0.0)


if __name__ == "__main__":
    key = jax.random.PRNGKey(0)
    k_x1, k_x2, k_x3, k_l1, k_l2 = jax.random.split(key, 5)

    in_size, hidden, out_size = 20, 100, 10
    w1, b1 = init_linear(k_l1, in_size, hidden)
    w2, b2 = init_linear(k_l2, hidden, out_size)

    # Batches exercising: single tile (8), non-multiple-of-8 batch with a partial last block (37),
    # and a multi-tile grid with the large 1024-row tile + partial tail (2500).
    for kk, batch in ((k_x1, 8), (k_x2, 37), (k_x3, 2500)):
        x = jax.random.normal(kk, (batch, in_size), jnp.float32)

        out = jax.block_until_ready(net_forward(x, w1, b1, w2, b2))
        assert out.shape == (batch, out_size)

        ref = _reference_f32(x, w1, b1, w2, b2)
        assert jnp.allclose(out, ref, atol=5e-2, rtol=5e-2), "mismatch vs f32 reference"
        assert bool(jnp.all(out >= 0.0)), "ReLU output must be non-negative"

    print("KERNEL_OK")
</pallas_src>

<mosaic_0001>
module attributes {stable_mosaic.version = 11 : i64} {
  func.func @mlp_kernel(%arg0: i32, %arg1: memref<8x20xf32, #tpu.memory_space<vmem>>, %arg2: memref<20x128xf32, #tpu.memory_space<vmem>>, %arg3: memref<1x128xf32, #tpu.memory_space<vmem>>, %arg4: memref<128x10xf32, #tpu.memory_space<vmem>>, %arg5: memref<1x10xf32, #tpu.memory_space<vmem>>, %arg6: memref<8x10xf32, #tpu.memory_space<vmem>>) attributes {dimension_semantics = [#tpu.dimension_semantics<parallel>], iteration_bounds = array<i64: 1>, scalar_prefetch = 0 : i64, scratch_operands = 0 : i64, tpu.core_type = #tpu.core_type<tc>, window_params = [{transform_indices = @transform_0, window_bounds = array<i64: 8, 20>}, {pipeline_mode = #tpu.pipeline_mode<synchronous>, transform_indices = @transform_1, window_bounds = array<i64: 20, 128>}, {pipeline_mode = #tpu.pipeline_mode<synchronous>, transform_indices = @transform_2, window_bounds = array<i64: 1, 128>}, {pipeline_mode = #tpu.pipeline_mode<synchronous>, transform_indices = @transform_3, window_bounds = array<i64: 128, 10>}, {pipeline_mode = #tpu.pipeline_mode<synchronous>, transform_indices = @transform_4, window_bounds = array<i64: 1, 10>}, {transform_indices = @transform_5, window_bounds = array<i64: 8, 10>}]} {
    %c0 = arith.constant 0 : index
    %c0_0 = arith.constant 0 : index
    %0 = vector.load %arg1[%c0, %c0_0] : memref<8x20xf32, #tpu.memory_space<vmem>>, vector<8x20xf32>
    %c0_1 = arith.constant 0 : index
    %c0_2 = arith.constant 0 : index
    %1 = vector.load %arg2[%c0_1, %c0_2] : memref<20x128xf32, #tpu.memory_space<vmem>>, vector<20x128xf32>
    %cst = arith.constant dense<0.000000e+00> : vector<8x128xf32>
    %2 = tpu.matmul %0, %1, %cst {dimension_numbers = #tpu.dot_dimension_numbers<[1], [0], [0], [1], [0, 0, 1, 1], [], []>} : vector<8x20xf32>, vector<20x128xf32>, vector<8x128xf32> -> vector<8x128xf32>
    %c0_3 = arith.constant 0 : index
    %c0_4 = arith.constant 0 : index
    %3 = vector.load %arg3[%c0_3, %c0_4] : memref<1x128xf32, #tpu.memory_space<vmem>>, vector<1x128xf32>
    %4 = vector.broadcast %3 : vector<1x128xf32> to vector<8x128xf32>
    %5 = arith.addf %2, %4 : vector<8x128xf32>
    %cst_5 = arith.constant 0.000000e+00 : f32
    %6 = vector.broadcast %cst_5 : f32 to vector<8x128xf32>
    %7 = arith.maximumf %5, %6 : vector<8x128xf32>
    %c0_6 = arith.constant 0 : index
    %c0_7 = arith.constant 0 : index
    %8 = vector.load %arg4[%c0_6, %c0_7] : memref<128x10xf32, #tpu.memory_space<vmem>>, vector<128x10xf32>
    %cst_8 = arith.constant dense<0.000000e+00> : vector<8x10xf32>
    %9 = tpu.matmul %7, %8, %cst_8 {dimension_numbers = #tpu.dot_dimension_numbers<[1], [0], [0], [1], [0, 0, 1, 1], [], []>} : vector<8x128xf32>, vector<128x10xf32>, vector<8x10xf32> -> vector<8x10xf32>
    %c0_9 = arith.constant 0 : index
    %c0_10 = arith.constant 0 : index
    %10 = vector.load %arg5[%c0_9, %c0_10] : memref<1x10xf32, #tpu.memory_space<vmem>>, vector<1x10xf32>
    %11 = vector.broadcast %10 : vector<1x10xf32> to vector<8x10xf32>
    %12 = arith.addf %9, %11 : vector<8x10xf32>
    %cst_11 = arith.constant 0.000000e+00 : f32
    %13 = vector.broadcast %cst_11 : f32 to vector<8x10xf32>
    %14 = arith.maximumf %12, %13 : vector<8x10xf32>
    %c0_12 = arith.constant 0 : index
    %c0_13 = arith.constant 0 : index
    %15 = vector.load %arg6[%c0_12, %c0_13] : memref<8x10xf32, #tpu.memory_space<vmem>>, vector<8x10xf32>
    tpu.vector_store %arg6[%c0_12, %c0_13], %14 {strides = array<i32>} : memref<8x10xf32, #tpu.memory_space<vmem>>, vector<8x10xf32>,
    return
  }
  func.func @transform_0(%arg0: i32) -> (i32, i32) {
    %c0_i32 = arith.constant 0 : i32
    %c0_i32_0 = arith.constant 0 : i32
    return %arg0, %c0_i32 : i32, i32
  }
  func.func @transform_1(%arg0: i32) -> (i32, i32) {
    %c0_i32 = arith.constant 0 : i32
    %c0_i32_0 = arith.constant 0 : i32
    %c0_i32_1 = arith.constant 0 : i32
    return %c0_i32, %c0_i32_0 : i32, i32
  }
  func.func @transform_2(%arg0: i32) -> (i32, i32) {
    %c0_i32 = arith.constant 0 : i32
    %c0_i32_0 = arith.constant 0 : i32
    %c0_i32_1 = arith.constant 0 : i32
    return %c0_i32, %c0_i32_0 : i32, i32
  }
  func.func @transform_3(%arg0: i32) -> (i32, i32) {
    %c0_i32 = arith.constant 0 : i32
    %c0_i32_0 = arith.constant 0 : i32
    %c0_i32_1 = arith.constant 0 : i32
    return %c0_i32, %c0_i32_0 : i32, i32
  }
  func.func @transform_4(%arg0: i32) -> (i32, i32) {
    %c0_i32 = arith.constant 0 : i32
    %c0_i32_0 = arith.constant 0 : i32
    %c0_i32_1 = arith.constant 0 : i32
    return %c0_i32, %c0_i32_0 : i32, i32
  }
  func.func @transform_5(%arg0: i32) -> (i32, i32) {
    %c0_i32 = arith.constant 0 : i32
    %c0_i32_0 = arith.constant 0 : i32
    return %arg0, %c0_i32 : i32, i32
  }
}

</mosaic_0001>

<llo_original>
// kernel: net_forward.1
$region0: #{net_forward.1}
  #allocation0 [shape = 'u32[]', space=smem, size = 0x4, offset = 0x4, fixed_abs, tag = 'smem constant byte address 0x4 - core index']
  #allocation1 [shape = 'u32[144,128]{1,0:T(1,128)}', space=vmem, size = 0x12000, scoped, tag = 'internal scratch']
  %s0 = inlined_call_operand.vmem [shape: f32[8,20], index: 0, kind: input, shape index: {}]
  %s1 = inlined_call_operand.vmem [shape: f32[20,128], index: 1, kind: input, shape index: {}]
  %s2 = inlined_call_operand.vmem [shape: f32[1,128], index: 2, kind: input, shape index: {}]
  %s3 = inlined_call_operand.vmem [shape: f32[128,10], index: 3, kind: input, shape index: {}]
  %s4 = inlined_call_operand.vmem [shape: f32[1,10], index: 4, kind: input, shape index: {}]
  %s5 = inlined_call_operand.hbm [shape: f32[8,10], index: 5, kind: output, shape index: {}]
  %s6 = sld [smem:[#allocation0]]
  $region30: #{net_forward.1} parent=0
    _
  %s8 = ssub.s32 1, %s6
  %s9 = scalar_select 0, %s8, %s6
  $region1: #{net_forward.1} parent=0
    #allocation2 [shape = 'u8[4096]{0}', space=vmem, size = 0x1000, scoped, tag = 'output window, operand 0, single buffered']
    #allocation3 [shape = 's32[1]{0}', space=sflag, size = 0x4, scoped, tag = 'scoped memory for net_forward.1']
    %10 = vsyncpa [#allocation3], 0
    // Predicated region
    $region2: #{net_forward.1} parent=1 // pred_check
      _
    $region3: #{net_forward.1} parent=1 // pred_check_branch
      %12 = sbr.rel (0) target = $region5
    $region4: #{net_forward.1} parent=1 // pred_region
      _
    $region5: #{net_forward.1} parent=1 // pred_fallthru
      _
    // Predicated region
    $region6: #{net_forward.1} parent=1 // pred_check
      _
    $region7: #{net_forward.1} parent=1 // pred_check_branch
      %14 = sbr.rel (0) target = $region9
    $region8: #{net_forward.1} parent=1 // pred_region
      _
    $region9: #{net_forward.1} parent=1 // pred_fallthru
      _
    // Predicated region
    $region10: #{net_forward.1} parent=1 // pred_check
      _
    $region11: #{net_forward.1} parent=1 // pred_check_branch
      %16 = sbr.rel (0) target = $region13
    $region12: #{net_forward.1} parent=1 // pred_region
      _
    $region13: #{net_forward.1} parent=1 // pred_fallthru
      _
    // Predicated region
    $region14: #{net_forward.1} parent=1 // pred_check
      _
    $region15: #{net_forward.1} parent=1 // pred_check_branch
      %18 = sbr.rel (0) target = $region17
    $region16: #{net_forward.1} parent=1 // pred_region
      _
    $region17: #{net_forward.1} parent=1 // pred_fallthru
      _
    // Predicated region
    $region18: #{net_forward.1} parent=1 // pred_check
      _
    $region19: #{net_forward.1} parent=1 // pred_check_branch
      %20 = sbr.rel (0) target = $region21
    $region20: #{net_forward.1} parent=1 // pred_region
      _
    $region21: #{net_forward.1} parent=1 // pred_fallthru
      _
    %v21 = vld [vmem:[%s0] sm:$0xff]
    %v22 = vld [vmem:[%s1] sm:$0xff]
    %v23 = vld [vmem:[%s1 + $0x8] sm:$0xff]
    %v24 = vld [vmem:[%s1 + $0x10] sm:$0xf]
    %v25 = vld [vmem:[%s2] sm:$0x1]
    %v27 = vlaneseq
    %v28 = vshrl.u32 %v27, 7
    %v29 = vsub.s32 0, %v28
    %v30 = vrot.slane %v25, %v29
    %vm32 = vcmask 162816
    %v34 = vsel %vm32, %v21, 0
    %vm36 = vcmask 1043456
    %v38 = vsel %vm36, %v24, 0
    %40 = vmatprep.subr.mxu0 0.0
    %41 = vmatpush1.msra.mxu0 %v22
    %42 = vmatprep.subr.mxu0 0.0
    %43 = vmatpush1.msra.mxu0 %v23
    %44 = vmatprep.subr.mxu0 0.0
    %45 = vmatpush1.msra.mxu0 %v38
    %46 = vmatprep.subr.mxu0 0.0
    %47 = vmatpush1.msra.mxu0 0.0
    %48 = vmatprep.subr.mxu0 0.0
    %49 = vmatpush1.msra.mxu0 0.0
    %50 = vmatprep.subr.mxu0 0.0
    %51 = vmatpush1.msra.mxu0 0.0
    %52 = vmatprep.subr.mxu0 0.0
    %53 = vmatpush1.msra.mxu0 0.0
    %54 = vmatprep.subr.mxu0 0.0
    %55 = vmatpush1.msra.mxu0 0.0
    %56 = vmatprep.subr.mxu0 0.0
    %57 = vmatpush1.msra.mxu0 0.0
    %58 = vmatprep.subr.mxu0 0.0
    %59 = vmatpush1.msra.mxu0 0.0
    %60 = vmatprep.subr.mxu0 0.0
    %61 = vmatpush1.msra.mxu0 0.0
    %62 = vmatprep.subr.mxu0 0.0
    %63 = vmatpush1.msra.mxu0 0.0
    %64 = vmatprep.subr.mxu0 0.0
    %65 = vmatpush1.msra.mxu0 0.0
    %66 = vmatprep.subr.mxu0 0.0
    %67 = vmatpush1.msra.mxu0 0.0
    %68 = vmatprep.subr.mxu0 0.0
    %69 = vmatpush1.msra.mxu0 0.0
    %70 = vmatprep.subr.mxu0 0.0
    %71 = vmatpush1.msra.mxu0 0.0
    %72 = vmatprep.subr.mxu0 0.0
    %73 = vmatpush1.msra.mxu0 0.0
    %74 = vmatprep.subr.mxu0 0.0
    %75 = vmatpush1.msra.mxu0 0.0
    %76 = vmatprep.subr.mxu0 0.0
    %77 = vmatpush1.msra.mxu0 0.0
    %78 = vmatprep.subr.mxu0 0.0
    %79 = vmatpush1.msra.mxu0 0.0
    %80 = vmatprep.subr.mxu0 0.0
    %81 = vmatpush1.msra.mxu0 0.0
    %82 = vmatprep.subr.mxu0 0.0
    %83 = vmatpush1.msra.mxu0 0.0
    %84 = vmatprep.subr.mxu0 0.0
    %85 = vmatpush1.msra.mxu0 0.0
    %86 = vmatprep.subr.mxu0 0.0
    %87 = vmatpush1.msra.mxu0 0.0
    %88 = vmatprep.subr.mxu0 0.0
    %89 = vmatpush1.msra.mxu0 0.0
    %90 = vmatprep.subr.mxu0 0.0
    %91 = vmatpush1.msra.mxu0 0.0
    %92 = vmatprep.subr.mxu0 0.0
    %93 = vmatpush1.msra.mxu0 0.0
    %94 = vmatprep.subr.mxu0 0.0
    %95 = vmatpush1.msra.mxu0 0.0
    %96 = vmatprep.subr.mxu0 0.0
    %97 = vmatpush1.msra.mxu0 0.0
    %98 = vmatprep.subr.mxu0 0.0
    %99 = vmatpush1.msra.mxu0 0.0
    %100 = vmatprep.subr.mxu0 0.0
    %101 = vmatpush1.msra.mxu0 0.0
    %102 = vmatprep.subr.mxu0 0.0
    %103 = vmatpush1.msra.mxu0 0.0
    %104 = vmatprep.mubr.f32.mxu0 0.0
    %105 = vmatmul.mubr.f32.gmra.mrb[0].mxu0 %v34
    %v106 = vpop.f32.mrb[0].mxu0
    %v107 = vadd.f32 %v30, %v106
    %v108 = vpop.f32.mrb[0].mxu0
    %109 = vdwg.mxu0
    %v110 = vmax.f32 %v107, 0.0
    %v111 = vld [vmem:[%s3] sm:$0xff]
    %v112 = vld [vmem:[%s3 + $0x8] sm:$0xff]
    %v113 = vld [vmem:[%s3 + $0x10] sm:$0xff]
    %v114 = vld [vmem:[%s3 + $0x18] sm:$0xff]
    %v115 = vld [vmem:[%s3 + $0x20] sm:$0xff]
    %v116 = vld [vmem:[%s3 + $0x28] sm:$0xff]
    %v117 = vld [vmem:[%s3 + $0x30] sm:$0xff]
    %v118 = vld [vmem:[%s3 + $0x38] sm:$0xff]
    %v119 = vld [vmem:[%s3 + $0x40] sm:$0xff]
    %v120 = vld [vmem:[%s3 + $0x48] sm:$0xff]
    %v121 = vld [vmem:[%s3 + $0x50] sm:$0xff]
    %v122 = vld [vmem:[%s3 + $0x58] sm:$0xff]
    %v123 = vld [vmem:[%s3 + $0x60] sm:$0xff]
    %v124 = vld [vmem:[%s3 + $0x68] sm:$0xff]
    %v125 = vld [vmem:[%s3 + $0x70] sm:$0xff]
    %v126 = vld [vmem:[%s3 + $0x78] sm:$0xff]
    %v127 = vld [vmem:[%s4] sm:$0x1]
    %v129 = vlaneseq
    %v130 = vshrl.u32 %v129, 7
    %v131 = vsub.s32 0, %v130
    %v132 = vrot.slane %v127, %v131
    %134 = vmatprep.subr.mxu0 0.0
    %135 = vmatpush1.msra.mxu0 %v111
    %136 = vmatprep.subr.mxu0 0.0
    %137 = vmatpush1.msra.mxu0 %v112
    %138 = vmatprep.subr.mxu0 0.0
    %139 = vmatpush1.msra.mxu0 %v113
    %140 = vmatprep.subr.mxu0 0.0
    %141 = vmatpush1.msra.mxu0 %v114
    %142 = vmatprep.subr.mxu0 0.0
    %143 = vmatpush1.msra.mxu0 %v115
    %144 = vmatprep.subr.mxu0 0.0
    %145 = vmatpush1.msra.mxu0 %v116
    %146 = vmatprep.subr.mxu0 0.0
    %147 = vmatpush1.msra.mxu0 %v117
    %148 = vmatprep.subr.mxu0 0.0
    %149 = vmatpush1.msra.mxu0 %v118
    %150 = vmatprep.subr.mxu0 0.0
    %151 = vmatpush1.msra.mxu0 %v119
    %152 = vmatprep.subr.mxu0 0.0
    %153 = vmatpush1.msra.mxu0 %v120
    %154 = vmatprep.subr.mxu0 0.0
    %155 = vmatpush1.msra.mxu0 %v121
    %156 = vmatprep.subr.mxu0 0.0
    %157 = vmatpush1.msra.mxu0 %v122
    %158 = vmatprep.subr.mxu0 0.0
    %159 = vmatpush1.msra.mxu0 %v123
    %160 = vmatprep.subr.mxu0 0.0
    %161 = vmatpush1.msra.mxu0 %v124
    %162 = vmatprep.subr.mxu0 0.0
    %163 = vmatpush1.msra.mxu0 %v125
    %164 = vmatprep.subr.mxu0 0.0
    %165 = vmatpush1.msra.mxu0 %v126
    %166 = vmatprep.subr.mxu0 0.0
    %167 = vmatpush1.msra.mxu0 0.0
    %168 = vmatprep.subr.mxu0 0.0
    %169 = vmatpush1.msra.mxu0 0.0
    %170 = vmatprep.subr.mxu0 0.0
    %171 = vmatpush1.msra.mxu0 0.0
    %172 = vmatprep.subr.mxu0 0.0
    %173 = vmatpush1.msra.mxu0 0.0
    %174 = vmatprep.subr.mxu0 0.0
    %175 = vmatpush1.msra.mxu0 0.0
    %176 = vmatprep.subr.mxu0 0.0
    %177 = vmatpush1.msra.mxu0 0.0
    %178 = vmatprep.subr.mxu0 0.0
    %179 = vmatpush1.msra.mxu0 0.0
    %180 = vmatprep.subr.mxu0 0.0
    %181 = vmatpush1.msra.mxu0 0.0
    %182 = vmatprep.subr.mxu0 0.0
    %183 = vmatpush1.msra.mxu0 0.0
    %184 = vmatprep.subr.mxu0 0.0
    %185 = vmatpush1.msra.mxu0 0.0
    %186 = vmatprep.subr.mxu0 0.0
    %187 = vmatpush1.msra.mxu0 0.0
    %188 = vmatprep.subr.mxu0 0.0
    %189 = vmatpush1.msra.mxu0 0.0
    %190 = vmatprep.subr.mxu0 0.0
    %191 = vmatpush1.msra.mxu0 0.0
    %192 = vmatprep.subr.mxu0 0.0
    %193 = vmatpush1.msra.mxu0 0.0
    %194 = vmatprep.subr.mxu0 0.0
    %195 = vmatpush1.msra.mxu0 0.0
    %196 = vmatprep.subr.mxu0 0.0
    %197 = vmatpush1.msra.mxu0 0.0
    %198 = vmatprep.mubr.f32.mxu0 0.0
    %199 = vmatmul.mubr.f32.gmra.mrb[0].mxu0 %v110
    %v200 = vpop.f32.mrb[0].mxu0
    %v201 = vadd.f32 %v132, %v200
    %v202 = vpop.f32.mrb[0].mxu0
    %203 = vdwg.mxu0
    %v204 = vmax.f32 %v201, 0.0
    %vm205 = vcmask 80896
    %206 = vst.msk [vmem:[#allocation2] sm:$0xff] %vm205, %v204
    // Predicated region
    $region22: #{net_forward.1} parent=1 // pred_check
      _
    $region23: #{net_forward.1} parent=1 // pred_check_branch
      %208 = sbr.rel (0) target = $region25
    $region24: #{net_forward.1} parent=1 // pred_region
      %s210 = ssub.s32 128, 128
      %211 = vsyncadd [#allocation3], %s210
      %s213 = sshll.u32 [#allocation2], 4
      %s214 = int_to_ptr.vmem [resolvable:$true] %s213
      %216 = dma.vmem_to_hbm [thread:$0]  %s214, 128, %s5, [#allocation3]
    $region25: #{net_forward.1} parent=1 // pred_fallthru
      _
    // Predicated region
    $region26: #{net_forward.1} parent=1 // pred_check
      _
    $region27: #{net_forward.1} parent=1 // pred_check_branch
      %218 = sbr.rel (0) target = $region29
    $region28: #{net_forward.1} parent=1 // pred_region
      %219 = dma.done [#allocation3], 128
    $region29: #{net_forward.1} parent=1 // pred_fallthru
      _
    %220 = vsyncpa [#allocation3], 1

</llo_original>
